<compile_context>
chip_gen: v7x
topology: tpu7x:2x2x1
jax: 0.10.0
libtpu: 0.0.40
codegen_flags: <defaults>
</compile_context>

<pallas_src>
import typing

import jax
import jax.numpy as jnp
from jax.experimental import pallas as pl
from jax.experimental.pallas import tpu as pltpu


_LANES = 512                      # lane-dense last dim (multiple of 128)
_SUBLANE = 8
_CHUNK_BYTES = 8 * 1024 * 1024    # 8 MiB contiguous DMA chunks
_MAX_CHUNKS = 32                  # cap the static unroll of the issue loop
_N_INFLIGHT = 4                   # DMAs kept in flight


def _make_hbm_copy_kernel(chunks: typing.List[typing.Tuple[int, int]]):
    """Kernel streaming `chunks` = [(row_off, n_rows), ...] HBM -> HBM."""

    def kernel(x_hbm, o_hbm, sems):
        pending = {}  # semaphore slot -> in-flight DMA descriptor
        for c, (off, nrows) in enumerate(chunks):
            slot = c % _N_INFLIGHT
            if slot in pending:           # bound the number of in-flight DMAs
                pending[slot].wait()
            cp = pltpu.make_async_copy(
                x_hbm.at[pl.ds(off, nrows), :],
                o_hbm.at[pl.ds(off, nrows), :],
                sems.at[slot],
            )
            cp.start()
            pending[slot] = cp
        for cp in pending.values():       # drain remaining DMAs
            cp.wait()

    return kernel


def _hbm_to_hbm_copy(slab2d: jax.Array) -> jax.Array:
    """Single Pallas call: chunked DMA copy of a (rows, _LANES) f32 slab."""
    rows, lanes = slab2d.shape

    bytes_per_row = lanes * 4  # float32
    chunk_rows = max(_SUBLANE, _CHUNK_BYTES // bytes_per_row)
    # Cap the chunk count (static unroll size) by growing chunks if needed;
    # DMA chunks have no VMEM footprint, so bigger is free.
    min_chunk_rows = -(-rows // _MAX_CHUNKS)
    min_chunk_rows = -(-min_chunk_rows // _SUBLANE) * _SUBLANE
    chunk_rows = max(chunk_rows, min_chunk_rows)

    chunks = []
    off = 0
    while off < rows:
        chunks.append((off, min(chunk_rows, rows - off)))
        off += chunk_rows

    return pl.pallas_call(
        _make_hbm_copy_kernel(chunks),
        out_shape=jax.ShapeDtypeStruct((rows, lanes), jnp.float32),
        in_specs=[pl.BlockSpec(memory_space=pl.ANY)],
        out_specs=pl.BlockSpec(memory_space=pl.ANY),
        scratch_shapes=[pltpu.SemaphoreType.DMA((_N_INFLIGHT,))],
    )(slab2d)


def _materialize_all(
    raw: typing.Dict[str, jax.Array]
) -> typing.Dict[str, jax.Array]:
    """Flatten + concat + pad all buffers into one lane-dense slab, copy once
    through the Pallas DMA kernel, then split back into named buffers."""
    if not raw:
        return {}

    layout: typing.Dict[str, typing.Tuple[int, int, typing.Tuple[int, ...]]] = {}
    flats = []
    off = 0
    for name, arr in raw.items():
        flat = arr.reshape(-1).astype(jnp.float32)
        layout[name] = (off, flat.shape[0], arr.shape)
        flats.append(flat)
        off += flat.shape[0]

    pad = (-off) % (_SUBLANE * _LANES)   # pad once -> always (8,128)-friendly
    if pad:
        flats.append(jnp.zeros((pad,), jnp.float32))
    slab = jnp.concatenate(flats).reshape(-1, _LANES)

    out_flat = _hbm_to_hbm_copy(slab).reshape(-1)

    return {
        name: out_flat[o:o + n].reshape(shape)
        for name, (o, n, shape) in layout.items()
    }


class NpyPallas:
    """JAX/Pallas equivalent of the PyTorch `Npy` module.

    Each kwarg maps a buffer name to a shape; contents are generated
    deterministically (stand-in for np.load(file).astype(float32)), then
    materialized ONCE through a single batched Pallas HBM->HBM DMA kernel and
    cached.  The forward pass ignores its input and returns the cached buffers
    — no kernel launch and no HBM traffic on the hot path, matching
    register_buffer + named_buffers() semantics.
    """

    def __init__(self, **buffer_shapes: typing.Tuple[int, ...]) -> None:
        key = jax.random.PRNGKey(0)
        self._raw: typing.Dict[str, jax.Array] = {}
        for name, shape in buffer_shapes.items():
            key, sub = jax.random.split(key)
            self._raw[name] = jax.random.normal(sub, shape, dtype=jnp.float32)
        # One-time batched materialization (the ".npy load" equivalent).
        self._buffers = _materialize_all(self._raw)

    def __call__(self, tensor: jax.Array) -> typing.Dict[str, jax.Array]:
        # Forward ignores `tensor` (exactly like the PyTorch module) and
        # returns the registered buffers. Zero-cost: just the cached dict.
        del tensor
        return dict(self._buffers)


if __name__ == "__main__":
    # Deterministic example input (ignored by forward, as in the PyTorch module).
    x = jax.random.normal(jax.random.PRNGKey(0), (2, 4, 16, 16), dtype=jnp.float32)

    # Synthetic buffers (stand-ins for .npy contents):
    #   grid/weights: tiny buffers (batched into the single slab copy)
    #   lut:          large enough to exercise multiple 8 MiB DMA chunks
    #   ragged:       non-128-divisible buffer (handled by slab padding)
    module = NpyPallas(
        grid=(16, 128),
        weights=(8, 256),
        lut=(1024, 4096),
        ragged=(7, 33),
    )

    result = module(x)

    # Block on results and check correctness (exact f32 identity of buffers).
    for name, arr in result.items():
        jax.block_until_ready(arr)
        ref = module._raw[name]
        assert arr.shape == ref.shape and arr.dtype == jnp.float32
        assert bool(jnp.all(arr == ref))

    print("KERNEL_OK")
</pallas_src>

<mosaic_0001>
module attributes {stable_mosaic.version = 11 : i64} {
  func.func @kernel(%arg0: memref<8208x512xf32, #tpu.memory_space<any>>, %arg1: memref<8208x512xf32, #tpu.memory_space<any>>, %arg2: memref<4x!tpu.dma_semaphore, #tpu.memory_space<semaphore_mem>>) attributes {dimension_semantics = [], scalar_prefetch = 0 : i64, scratch_operands = 1 : i64, tpu.core_type = #tpu.core_type<tc>} {
    %c0_i32 = arith.constant 0 : i32
    %c0_i32_0 = arith.constant 0 : i32
    %c0_i32_1 = arith.constant 0 : i32
    %0 = tpu.memref_slice %arg0[%c0_i32_0, %c0_i32_1] : memref<8208x512xf32, #tpu.memory_space<any>> -> memref<4096x512xf32, #tpu.memory_space<any>>
    %c0_i32_2 = arith.constant 0 : i32
    %c0_i32_3 = arith.constant 0 : i32
    %1 = tpu.memref_slice %arg1[%c0_i32_2, %c0_i32_3] : memref<8208x512xf32, #tpu.memory_space<any>> -> memref<4096x512xf32, #tpu.memory_space<any>>
    %2 = tpu.memref_slice %arg2[%c0_i32] : memref<4x!tpu.dma_semaphore, #tpu.memory_space<semaphore_mem>> -> memref<1x!tpu.dma_semaphore, #tpu.memory_space<semaphore_mem>>
    %3 = tpu.memref_squeeze %2 : memref<1x!tpu.dma_semaphore, #tpu.memory_space<semaphore_mem>> -> memref<!tpu.dma_semaphore, #tpu.memory_space<semaphore_mem>>
    tpu.enqueue_dma source(%0 : memref<4096x512xf32, #tpu.memory_space<any>>) target(%1 : memref<4096x512xf32, #tpu.memory_space<any>>) target_semaphore(%3 : memref<!tpu.dma_semaphore, #tpu.memory_space<semaphore_mem>>)
    %c1_i32 = arith.constant 1 : i32
    %c4096_i32 = arith.constant 4096 : i32
    %c0_i32_4 = arith.constant 0 : i32
    %4 = tpu.memref_slice %arg0[%c4096_i32, %c0_i32_4] : memref<8208x512xf32, #tpu.memory_space<any>> -> memref<4096x512xf32, #tpu.memory_space<any>>
    %c4096_i32_5 = arith.constant 4096 : i32
    %c0_i32_6 = arith.constant 0 : i32
    %5 = tpu.memref_slice %arg1[%c4096_i32_5, %c0_i32_6] : memref<8208x512xf32, #tpu.memory_space<any>> -> memref<4096x512xf32, #tpu.memory_space<any>>
    %6 = tpu.memref_slice %arg2[%c1_i32] : memref<4x!tpu.dma_semaphore, #tpu.memory_space<semaphore_mem>> -> memref<1x!tpu.dma_semaphore, #tpu.memory_space<semaphore_mem>>
    %7 = tpu.memref_squeeze %6 : memref<1x!tpu.dma_semaphore, #tpu.memory_space<semaphore_mem>> -> memref<!tpu.dma_semaphore, #tpu.memory_space<semaphore_mem>>
    tpu.enqueue_dma source(%4 : memref<4096x512xf32, #tpu.memory_space<any>>) target(%5 : memref<4096x512xf32, #tpu.memory_space<any>>) target_semaphore(%7 : memref<!tpu.dma_semaphore, #tpu.memory_space<semaphore_mem>>)
    %c2_i32 = arith.constant 2 : i32
    %c8192_i32 = arith.constant 8192 : i32
    %c0_i32_7 = arith.constant 0 : i32
    %8 = tpu.memref_slice %arg0[%c8192_i32, %c0_i32_7] : memref<8208x512xf32, #tpu.memory_space<any>> -> memref<16x512xf32, #tpu.memory_space<any>>
    %c8192_i32_8 = arith.constant 8192 : i32
    %c0_i32_9 = arith.constant 0 : i32
    %9 = tpu.memref_slice %arg1[%c8192_i32_8, %c0_i32_9] : memref<8208x512xf32, #tpu.memory_space<any>> -> memref<16x512xf32, #tpu.memory_space<any>>
    %10 = tpu.memref_slice %arg2[%c2_i32] : memref<4x!tpu.dma_semaphore, #tpu.memory_space<semaphore_mem>> -> memref<1x!tpu.dma_semaphore, #tpu.memory_space<semaphore_mem>>
    %11 = tpu.memref_squeeze %10 : memref<1x!tpu.dma_semaphore, #tpu.memory_space<semaphore_mem>> -> memref<!tpu.dma_semaphore, #tpu.memory_space<semaphore_mem>>
    tpu.enqueue_dma source(%8 : memref<16x512xf32, #tpu.memory_space<any>>) target(%9 : memref<16x512xf32, #tpu.memory_space<any>>) target_semaphore(%11 : memref<!tpu.dma_semaphore, #tpu.memory_space<semaphore_mem>>)
    %c0_i32_10 = arith.constant 0 : i32
    %c0_i32_11 = arith.constant 0 : i32
    %c0_i32_12 = arith.constant 0 : i32
    %12 = tpu.memref_slice %arg0[%c0_i32_11, %c0_i32_12] : memref<8208x512xf32, #tpu.memory_space<any>> -> memref<4096x512xf32, #tpu.memory_space<any>>
    %c0_i32_13 = arith.constant 0 : i32
    %c0_i32_14 = arith.constant 0 : i32
    %13 = tpu.memref_slice %arg1[%c0_i32_13, %c0_i32_14] : memref<8208x512xf32, #tpu.memory_space<any>> -> memref<4096x512xf32, #tpu.memory_space<any>>
    %14 = tpu.memref_slice %arg2[%c0_i32_10] : memref<4x!tpu.dma_semaphore, #tpu.memory_space<semaphore_mem>> -> memref<1x!tpu.dma_semaphore, #tpu.memory_space<semaphore_mem>>
    %15 = tpu.memref_squeeze %14 : memref<1x!tpu.dma_semaphore, #tpu.memory_space<semaphore_mem>> -> memref<!tpu.dma_semaphore, #tpu.memory_space<semaphore_mem>>
    tpu.wait_dma2 semaphore(%15 : memref<!tpu.dma_semaphore, #tpu.memory_space<semaphore_mem>>) src(%12 : memref<4096x512xf32, #tpu.memory_space<any>>) dst(%13 : memref<4096x512xf32, #tpu.memory_space<any>>)
    %c1_i32_15 = arith.constant 1 : i32
    %c4096_i32_16 = arith.constant 4096 : i32
    %c0_i32_17 = arith.constant 0 : i32
    %16 = tpu.memref_slice %arg0[%c4096_i32_16, %c0_i32_17] : memref<8208x512xf32, #tpu.memory_space<any>> -> memref<4096x512xf32, #tpu.memory_space<any>>
    %c4096_i32_18 = arith.constant 4096 : i32
    %c0_i32_19 = arith.constant 0 : i32
    %17 = tpu.memref_slice %arg1[%c4096_i32_18, %c0_i32_19] : memref<8208x512xf32, #tpu.memory_space<any>> -> memref<4096x512xf32, #tpu.memory_space<any>>
    %18 = tpu.memref_slice %arg2[%c1_i32_15] : memref<4x!tpu.dma_semaphore, #tpu.memory_space<semaphore_mem>> -> memref<1x!tpu.dma_semaphore, #tpu.memory_space<semaphore_mem>>
    %19 = tpu.memref_squeeze %18 : memref<1x!tpu.dma_semaphore, #tpu.memory_space<semaphore_mem>> -> memref<!tpu.dma_semaphore, #tpu.memory_space<semaphore_mem>>
    tpu.wait_dma2 semaphore(%19 : memref<!tpu.dma_semaphore, #tpu.memory_space<semaphore_mem>>) src(%16 : memref<4096x512xf32, #tpu.memory_space<any>>) dst(%17 : memref<4096x512xf32, #tpu.memory_space<any>>)
    %c2_i32_20 = arith.constant 2 : i32
    %c8192_i32_21 = arith.constant 8192 : i32
    %c0_i32_22 = arith.constant 0 : i32
    %20 = tpu.memref_slice %arg0[%c8192_i32_21, %c0_i32_22] : memref<8208x512xf32, #tpu.memory_space<any>> -> memref<16x512xf32, #tpu.memory_space<any>>
    %c8192_i32_23 = arith.constant 8192 : i32
    %c0_i32_24 = arith.constant 0 : i32
    %21 = tpu.memref_slice %arg1[%c8192_i32_23, %c0_i32_24] : memref<8208x512xf32, #tpu.memory_space<any>> -> memref<16x512xf32, #tpu.memory_space<any>>
    %22 = tpu.memref_slice %arg2[%c2_i32_20] : memref<4x!tpu.dma_semaphore, #tpu.memory_space<semaphore_mem>> -> memref<1x!tpu.dma_semaphore, #tpu.memory_space<semaphore_mem>>
    %23 = tpu.memref_squeeze %22 : memref<1x!tpu.dma_semaphore, #tpu.memory_space<semaphore_mem>> -> memref<!tpu.dma_semaphore, #tpu.memory_space<semaphore_mem>>
    tpu.wait_dma2 semaphore(%23 : memref<!tpu.dma_semaphore, #tpu.memory_space<semaphore_mem>>) src(%20 : memref<16x512xf32, #tpu.memory_space<any>>) dst(%21 : memref<16x512xf32, #tpu.memory_space<any>>)
    return
  }
}

</mosaic_0001>

<llo_original>
// kernel: tpu_custom_call.1
$region0: #{tpu_custom_call.1}
  #allocation0 [shape = 'u32[]', space=smem, size = 0x4, offset = 0x4, fixed_abs, tag = 'smem constant byte address 0x4 - core index']
  #allocation1 [shape = 'u32[144,128]{1,0:T(1,128)}', space=vmem, size = 0x12000, scoped, tag = 'internal scratch']
  #allocation2 [shape = 's32[4]{0}', space=sflag, size = 0x10, scoped, tag = 'scratch operand']
  #allocation3 [shape = 's32[]', space=sflag, size = 0x4, offset = 0, fixed_abs, tag = 'sflag constant byte address 0x0 - dummy sync flag']
  #allocation4 [shape = 'u32[0]{0}', space=smem, size = 0, offset = 0, fixed_abs, tag = 'smem constant byte address 0x0 - null']
  #allocation5 [shape = 's32[]', space=sflag, size = 0x4, offset = 0, fixed_abs, tag = 'sflag constant byte address 0x0 - dummy sync flag']
  #allocation6 [shape = 'u32[0]{0}', space=smem, size = 0, offset = 0, fixed_abs, tag = 'smem constant byte address 0x0 - null']
  #allocation7 [shape = 's32[]', space=sflag, size = 0x4, offset = 0, fixed_abs, tag = 'sflag constant byte address 0x0 - dummy sync flag']
  #allocation8 [shape = 'u32[0]{0}', space=smem, size = 0, offset = 0, fixed_abs, tag = 'smem constant byte address 0x0 - null']
  %s0 = inlined_call_operand.hbm [shape: f32[8208,512], index: 0, kind: input, shape index: {}]
  %s1 = inlined_call_operand.hbm [shape: f32[8208,512], index: 1, kind: output, shape index: {}]
  %s2 = sld [smem:[#allocation0]]
  $region2: #{tpu_custom_call.1} parent=0
    _
  %s4 = ssub.s32 1, %s2
  %s5 = scalar_select 0, %s4, %s2
  %s7 = sshll.u32 1, 14
  %s8 = sxor.u32 4294967295, %s7
  %s11 = sshll.u32 3, 24
  %s12 = sxor.u32 4294967295, %s11
  %s13 = sand.u32 0, %s12
  %s15 = sor.u32 %s13, 0
  %18 = dma.general %s0, 262144, %s1, [#allocation2], [#allocation3], [#allocation4], %s15, 0
  %s19 = scalar_lea.hbm %s0, 262144
  %s20 = scalar_lea.hbm %s1, 262144
  %s21 = scalar_lea.sflag [#allocation2], 1
  %s23 = sshll.u32 1, 14
  %s24 = sxor.u32 4294967295, %s23
  %s27 = sshll.u32 3, 24
  %s28 = sxor.u32 4294967295, %s27
  %s29 = sand.u32 0, %s28
  %s31 = sor.u32 %s29, 0
  %34 = dma.general %s19, 262144, %s20, %s21, [#allocation5], [#allocation6], %s31, 0
  %s35 = scalar_lea.hbm %s0, 524288
  %s36 = scalar_lea.hbm %s1, 524288
  %s37 = scalar_lea.sflag [#allocation2], 2
  %s39 = sshll.u32 1, 14
  %s40 = sxor.u32 4294967295, %s39
  %s43 = sshll.u32 3, 24
  %s44 = sxor.u32 4294967295, %s43
  %s45 = sand.u32 0, %s44
  %s47 = sor.u32 %s45, 0
  %50 = dma.general %s35, 1024, %s36, %s37, [#allocation7], [#allocation8], %s47, 0
  %s51 = smul.u32 8, 512
  %s52 = smul.u32 %s51, 4
  %s53 = sshll.u32 %s52, 4
  %54 = dma.done [#allocation2], %s53
  %s55 = sshll.u32 %s52, 4
  %56 = dma.done %s21, %s55
  %s57 = smul.u32 8, 2
  %s58 = smul.u32 %s57, 4
  %s59 = sshll.u32 %s58, 4
  %60 = dma.done %s37, %s59
  %61 = vsyncmov [#allocation2]
  %s62 = vpop.sfrf %61
  %p63 = scmp.eq.s32.totalorder %s62, 0
  %p64 = pneg %p63
  %66 = shalt.err (%p64)
  %s67 = scalar_lea.sflag [#allocation2], 1
  %68 = vsyncmov %s67
  %s69 = vpop.sfrf %68
  %p70 = scmp.eq.s32.totalorder %s69, 0
  %p71 = pneg %p70
  %73 = shalt.err (%p71)
  %s74 = scalar_lea.sflag [#allocation2], 2
  %75 = vsyncmov %s74
  %s76 = vpop.sfrf %75
  %p77 = scmp.eq.s32.totalorder %s76, 0
  %p78 = pneg %p77
  %80 = shalt.err (%p78)
  %s81 = scalar_lea.sflag [#allocation2], 3
  %82 = vsyncmov %s81
  %s83 = vpop.sfrf %82
  %p84 = scmp.eq.s32.totalorder %s83, 0
  %p85 = pneg %p84
  %87 = shalt.err (%p85)

</llo_original>
